<compile_context>
chip_gen: v5e
topology: v5e:2x2
jax: 0.10.0
libtpu: 0.0.40
codegen_flags: <defaults>
</compile_context>

<pallas_src>
import jax
import jax.numpy as jnp
from jax.experimental import pallas as pl
from jax.experimental.pallas import tpu as pltpu


def _cdiv(a, b):
    return -(-a // b)


def _round_up(x, m):
    return _cdiv(x, m) * m


def _logsigmoid(x):
    # numerically stable log(sigmoid(x)) = -softplus(-x)
    return -jax.nn.softplus(-x)


_OUT_LANES = 128                    # lane-dense partial-sum slot per shard
_LOSS_TILE_BYTES = 2 * 1024 * 1024  # target bytes of neg_score per grid step
_MAX_TILE_B = 2048                  # keeps (TB,1) per-row accumulators small
_CUBE_TILE_BYTES = 4 * 1024 * 1024  # target bytes of embedding rows per grid step


def _num_tensorcores():
    """Best-effort TensorCore count (2 on v7x); falls back to 1."""
    try:
        info = pltpu.get_tpu_info()
    except Exception:
        return 1
    for name in ("num_cores", "core_count", "num_tensorcores",
                 "tensorcore_count", "num_cores_per_chip", "cores_per_chip"):
        v = getattr(info, name, None)
        if isinstance(v, int) and 1 <= v <= 8:
            return min(v, 2)
    return 1


# --------------------------------------------------------------------------- #
# Kernel 1: main loss term (batch-tiled, per-row accumulators, optional 2-TC shard)
# --------------------------------------------------------------------------- #
def _make_loss_kernel(adv_temp, neg_adv, batch, tile_b, tiles_per_shard, needs_mask):
    def kernel(pos_ref, neg_ref, w_ref, out_ref, acc_p, acc_n, acc_w):
        c = pl.program_id(0)
        i = pl.program_id(1)

        @pl.when(i == 0)
        def _init():
            acc_p[...] = jnp.zeros_like(acc_p)
            acc_n[...] = jnp.zeros_like(acc_n)
            acc_w[...] = jnp.zeros_like(acc_w)

        neg = neg_ref[...]              # (TB, N)
        pos = pos_ref[...]              # (TB, 1)
        w = w_ref[...]                  # (TB, 1)

        if needs_mask:
            # Neutralize undefined padding rows (partial / duplicated tiles)
            # BEFORE any exp/softplus so garbage can never produce 0*inf NaNs.
            off = (c * tiles_per_shard + i) * tile_b
            ridx = jax.lax.broadcasted_iota(jnp.int32, (tile_b, 1), 0)
            rmask = ridx < (batch - off)
            neg = jnp.where(rmask, neg, 0.0)
            pos = jnp.where(rmask, pos, 0.0)
            w = jnp.where(rmask, w, 0.0)

        ls_neg = -jax.nn.softplus(neg)                       # logsigmoid(-neg)
        if neg_adv:
            logits = neg if adv_temp == 1.0 else neg * adv_temp
            m = jnp.max(logits, axis=1, keepdims=True)
            e = jnp.exp(logits - m)
            s_num = jnp.sum(e * ls_neg, axis=1, keepdims=True)
            s_den = jnp.sum(e, axis=1, keepdims=True)
            # exact reciprocal: softmax denominator must keep 1e-5 accuracy
            neg_row = s_num * pl.reciprocal(s_den, approx=False)   # (TB, 1)
        else:
            neg_row = jnp.mean(ls_neg, axis=1, keepdims=True)      # (TB, 1)

        pos_row = -jax.nn.softplus(-pos)                           # logsigmoid(pos)

        # per-row partials only; full reductions deferred to the epilogue
        acc_p[...] += w * pos_row
        acc_n[...] += w * neg_row
        acc_w[...] += w

        @pl.when(i == tiles_per_shard - 1)
        def _fin():
            # one cross-sublane reduce per shard; lane-dense (1,128) unmasked store
            lane = jax.lax.broadcasted_iota(jnp.int32, (1, _OUT_LANES), 1)
            v = jnp.where(lane == 0, jnp.sum(acc_p[...]), 0.0)
            v = jnp.where(lane == 1, jnp.sum(acc_n[...]), v)
            v = jnp.where(lane == 2, jnp.sum(acc_w[...]), v)
            out_ref[...] = v

    return kernel


# --------------------------------------------------------------------------- #
# Kernel 2: sum(|x|^3) over one embedding table (== ||table||_3 ** 3)
# --------------------------------------------------------------------------- #
def _make_cube_kernel(rows, tile_rows, tiles_per_shard, needs_mask):
    def kernel(x_ref, out_ref, acc_ref):
        c = pl.program_id(0)
        i = pl.program_id(1)

        @pl.when(i == 0)
        def _init():
            acc_ref[...] = jnp.zeros_like(acc_ref)

        x = x_ref[...].astype(jnp.float32)        # (TR, D)
        a = jnp.abs(x)
        cube = a * a * a                          # pure VPU work
        if needs_mask:
            off = (c * tiles_per_shard + i) * tile_rows
            ridx = jax.lax.broadcasted_iota(jnp.int32, (tile_rows, 1), 0)
            cube = jnp.where(ridx < (rows - off), cube, 0.0)
        acc_ref[...] += jnp.sum(cube, axis=0, keepdims=True)   # (1, D)

        @pl.when(i == tiles_per_shard - 1)
        def _fin():
            out_ref[...] = jnp.zeros_like(out_ref) + jnp.sum(acc_ref[...])

    return kernel


def cube_norm3_sum(table, *, shards=1, tile_rows=None):
    """sum(|table|^3) streamed straight from HBM (no concat / pad copies)."""
    t = jnp.asarray(table)
    if t.ndim != 2:
        t = t.reshape(-1, t.shape[-1])
    t = t.astype(jnp.float32)
    R, D = int(t.shape[0]), int(t.shape[1])

    if tile_rows is None:
        tr = max(8, 8 * max(1, (_CUBE_TILE_BYTES // (D * 4)) // 8))
    else:
        tr = max(8, _round_up(int(tile_rows), 8))
    tr = min(tr, _round_up(R, 8))

    n_tiles = _cdiv(R, tr)
    shards_eff = max(1, min(int(shards), n_tiles))
    tps = _cdiv(n_tiles, shards_eff)
    needs_clamp = shards_eff * tps > n_tiles
    needs_mask = (shards_eff * tps * tr) != R

    def x_map(c, i):
        b = c * tps + i
        if needs_clamp:
            b = jnp.minimum(b, n_tiles - 1)    # duplicated tiles are fully masked
        return (b, 0)

    kernel = _make_cube_kernel(R, tr, tps, needs_mask)
    partials = pl.pallas_call(
        kernel,
        out_shape=jax.ShapeDtypeStruct((1, shards_eff * _OUT_LANES), jnp.float32),
        grid=(shards_eff, tps),
        in_specs=[pl.BlockSpec((tr, D), x_map)],
        out_specs=pl.BlockSpec((1, _OUT_LANES), lambda c, i: (0, c)),
        scratch_shapes=[pltpu.VMEM((1, D), jnp.float32)],
        compiler_params=pltpu.CompilerParams(
            dimension_semantics=("parallel", "arbitrary"),
            vmem_limit_bytes=32 * 1024 * 1024),
        cost_estimate=pl.CostEstimate(
            flops=4 * R * D, transcendentals=0, bytes_accessed=4 * R * D),
    )(t)
    return jnp.sum(partials.reshape(shards_eff, _OUT_LANES)[:, 0])


# --------------------------------------------------------------------------- #
# Wrapper (equivalent of Adv_Loss.forward)
# --------------------------------------------------------------------------- #
def adv_loss(pos_score, neg_score, subsampling_weight, ent_emb, rel_emb, *,
             adv_temp=1.0, regularization=1e-5,
             negative_adversarial_sampling=True, use_weight=True,
             shards=None, tile_batch=None, reg_tile_rows=None):
    neg = jnp.asarray(neg_score, jnp.float32)
    B, N = int(neg.shape[0]), int(neg.shape[1])
    pos = jnp.reshape(jnp.asarray(pos_score, jnp.float32), (B, 1))
    if use_weight:
        w = jnp.reshape(jnp.asarray(subsampling_weight, jnp.float32), (B, 1))
    else:
        # ones-weights make sum(w*x)/sum(w) identical to mean(x)
        w = jnp.ones((B, 1), jnp.float32)

    if shards is None:
        shards = _num_tensorcores()
    shards = max(1, int(shards))

    # Batch tile: multiple of 8 rows, sized so the neg tile is ~2 MiB (double-buffered
    # ~4 MiB) and the (TB,1) per-row accumulators stay small -> fits v7x 32 MiB VMEM.
    if tile_batch is None:
        tb = max(8, min(_MAX_TILE_B,
                        8 * max(1, (_LOSS_TILE_BYTES // (N * 4)) // 8)))
    else:
        tb = max(8, _round_up(int(tile_batch), 8))
    tb = min(tb, _round_up(B, 8))

    nb = _cdiv(B, tb)
    shards_eff = max(1, min(shards, nb))
    nps = _cdiv(nb, shards_eff)
    needs_clamp = shards_eff * nps > nb
    needs_mask = (shards_eff * nps * tb) != B

    def row_map(c, i):
        b = c * nps + i
        if needs_clamp:
            b = jnp.minimum(b, nb - 1)
        return (b, 0)

    kernel = _make_loss_kernel(float(adv_temp),
                               bool(negative_adversarial_sampling),
                               B, tb, nps, needs_mask)

    partials = pl.pallas_call(
        kernel,
        out_shape=jax.ShapeDtypeStruct((1, shards_eff * _OUT_LANES), jnp.float32),
        grid=(shards_eff, nps),
        in_specs=[pl.BlockSpec((tb, 1), row_map),
                  pl.BlockSpec((tb, N), row_map),
                  pl.BlockSpec((tb, 1), row_map)],
        out_specs=pl.BlockSpec((1, _OUT_LANES), lambda c, i: (0, c)),
        scratch_shapes=[pltpu.VMEM((tb, 1), jnp.float32)] * 3,
        compiler_params=pltpu.CompilerParams(
            dimension_semantics=("parallel", "arbitrary"),
            vmem_limit_bytes=32 * 1024 * 1024),
        cost_estimate=pl.CostEstimate(
            flops=12 * B * N,
            transcendentals=3 * B * N,
            bytes_accessed=4 * (B * N + 2 * B) + 4 * shards_eff * _OUT_LANES),
    )(pos, neg, w)

    parts = partials.reshape(shards_eff, _OUT_LANES)
    p_sum = jnp.sum(parts[:, 0])
    n_sum = jnp.sum(parts[:, 1])
    w_sum = jnp.sum(parts[:, 2])
    loss = -0.5 * (p_sum + n_sum) / w_sum

    reg = regularization * (
        cube_norm3_sum(ent_emb, shards=shards, tile_rows=reg_tile_rows)
        + cube_norm3_sum(rel_emb, shards=shards, tile_rows=reg_tile_rows))
    return loss + reg


# --------------------------------------------------------------------------- #
# Pure-JAX reference (mirrors the PyTorch forward) for verification
# --------------------------------------------------------------------------- #
def adv_loss_ref(pos_score, neg_score, subsampling_weight, ent_emb, rel_emb, *,
                 adv_temp=1.0, regularization=1e-5,
                 negative_adversarial_sampling=True, use_weight=True):
    if negative_adversarial_sampling:
        p = jax.nn.softmax(neg_score * adv_temp, axis=1)
        neg = jnp.sum(p * _logsigmoid(-neg_score), axis=1)
    else:
        neg = jnp.mean(_logsigmoid(-neg_score), axis=1)
    pos = _logsigmoid(pos_score).reshape(neg.shape[0])
    if use_weight:
        w = subsampling_weight
        pos_loss = -jnp.sum(w * pos) / jnp.sum(w)
        neg_loss = -jnp.sum(w * neg) / jnp.sum(w)
    else:
        pos_loss = -jnp.mean(pos)
        neg_loss = -jnp.mean(neg)
    loss = (pos_loss + neg_loss) / 2
    reg = regularization * (jnp.sum(jnp.abs(ent_emb) ** 3)
                            + jnp.sum(jnp.abs(rel_emb) ** 3))
    return loss + reg


if __name__ == "__main__":
    key = jax.random.PRNGKey(0)
    k1, k2, k3, k4, k5 = jax.random.split(key, 5)

    B, N = 8, 128                    # batch of positives, negatives per positive
    num_ent, num_rel, dim = 70, 17, 48   # deliberately (8,128)-unaligned tables

    pos_score = jax.random.normal(k1, (B, 1), dtype=jnp.float32)
    neg_score = jax.random.normal(k2, (B, N), dtype=jnp.float32)
    subsampling_weight = jax.random.uniform(
        k3, (B,), dtype=jnp.float32, minval=0.5, maxval=1.5)
    ent_emb = 0.1 * jax.random.normal(k4, (num_ent, dim), dtype=jnp.float32)
    rel_emb = 0.1 * jax.random.normal(k5, (num_rel, dim), dtype=jnp.float32)

    configs = [
        dict(adv_temp=1.0, regularization=1e-5,
             negative_adversarial_sampling=True, use_weight=True),
        dict(adv_temp=0.5, regularization=1e-5,
             negative_adversarial_sampling=False, use_weight=False),
    ]
    for cfg in configs:
        out = jax.block_until_ready(
            adv_loss(pos_score, neg_score, subsampling_weight,
                     ent_emb, rel_emb, **cfg))
        ref = adv_loss_ref(pos_score, neg_score, subsampling_weight,
                           ent_emb, rel_emb, **cfg)
        assert jnp.allclose(out, ref, rtol=1e-5, atol=1e-5), (cfg, out, ref)

    # Ragged batch + forced small tiles + forced 2-way shard: exercises the clamped
    # index_map, in-kernel row masking (partial AND duplicated tiles) and the
    # multi-shard combine even on single-TensorCore chips (where it serializes).
    Bp = 36
    pos_p = jax.random.normal(k1, (Bp, 1), dtype=jnp.float32)
    neg_p = jax.random.normal(k2, (Bp, N), dtype=jnp.float32)
    w_p = jax.random.uniform(k3, (Bp,), dtype=jnp.float32, minval=0.5, maxval=1.5)
    cfg = dict(adv_temp=1.0, regularization=1e-5,
               negative_adversarial_sampling=True, use_weight=True)
    out = jax.block_until_ready(
        adv_loss(pos_p, neg_p, w_p, ent_emb, rel_emb,
                 shards=2, tile_batch=8, reg_tile_rows=16, **cfg))
    ref = adv_loss_ref(pos_p, neg_p, w_p, ent_emb, rel_emb, **cfg)
    assert jnp.allclose(out, ref, rtol=1e-5, atol=1e-5), (out, ref)

    print("KERNEL_OK")
</pallas_src>

<mosaic_0001>
module attributes {stable_mosaic.version = 11 : i64} {
  func.func @kernel(%arg0: i32, %arg1: i32, %arg2: memref<8x1xf32, #tpu.memory_space<vmem>>, %arg3: memref<8x128xf32, #tpu.memory_space<vmem>>, %arg4: memref<8x1xf32, #tpu.memory_space<vmem>>, %arg5: memref<1x128xf32, #tpu.memory_space<vmem>>, %arg6: memref<8x1xf32, #tpu.memory_space<vmem>>, %arg7: memref<8x1xf32, #tpu.memory_space<vmem>>, %arg8: memref<8x1xf32, #tpu.memory_space<vmem>>) attributes {dimension_semantics = [#tpu.dimension_semantics<parallel>, #tpu.dimension_semantics<arbitrary>], iteration_bounds = array<i64: 1, 1>, scalar_prefetch = 0 : i64, scratch_operands = 3 : i64, tpu.core_type = #tpu.core_type<tc>, window_params = [{transform_indices = @transform_0, window_bounds = array<i64: 8, 1>}, {transform_indices = @transform_1, window_bounds = array<i64: 8, 128>}, {transform_indices = @transform_2, window_bounds = array<i64: 8, 1>}, {transform_indices = @transform_3, window_bounds = array<i64: 1, 128>}]} {
    %c0_i32 = arith.constant 0 : i32
    %0 = arith.cmpi eq, %arg1, %c0_i32 : i32
    %1 = arith.extui %0 : i1 to i32
    %c0_i32_0 = arith.constant 0 : i32
    %2 = arith.cmpi ne, %1, %c0_i32_0 : i32
    scf.if %2 {
      %cst_29 = arith.constant 0.000000e+00 : f32
      %66 = vector.broadcast %cst_29 : f32 to vector<8x1xf32>
      %c0_30 = arith.constant 0 : index
      %c0_31 = arith.constant 0 : index
      %67 = vector.load %arg6[%c0_30, %c0_31] : memref<8x1xf32, #tpu.memory_space<vmem>>, vector<8x1xf32>
      tpu.vector_store %arg6[%c0_30, %c0_31], %66 {strides = array<i32>} : memref<8x1xf32, #tpu.memory_space<vmem>>, vector<8x1xf32>,
      %cst_32 = arith.constant 0.000000e+00 : f32
      %68 = vector.broadcast %cst_32 : f32 to vector<8x1xf32>
      %c0_33 = arith.constant 0 : index
      %c0_34 = arith.constant 0 : index
      %69 = vector.load %arg7[%c0_33, %c0_34] : memref<8x1xf32, #tpu.memory_space<vmem>>, vector<8x1xf32>
      tpu.vector_store %arg7[%c0_33, %c0_34], %68 {strides = array<i32>} : memref<8x1xf32, #tpu.memory_space<vmem>>, vector<8x1xf32>,
      %cst_35 = arith.constant 0.000000e+00 : f32
      %70 = vector.broadcast %cst_35 : f32 to vector<8x1xf32>
      %c0_36 = arith.constant 0 : index
      %c0_37 = arith.constant 0 : index
      %71 = vector.load %arg8[%c0_36, %c0_37] : memref<8x1xf32, #tpu.memory_space<vmem>>, vector<8x1xf32>
      tpu.vector_store %arg8[%c0_36, %c0_37], %70 {strides = array<i32>} : memref<8x1xf32, #tpu.memory_space<vmem>>, vector<8x1xf32>,
    } else {
    }
    %c0 = arith.constant 0 : index
    %c0_1 = arith.constant 0 : index
    %3 = vector.load %arg3[%c0, %c0_1] : memref<8x128xf32, #tpu.memory_space<vmem>>, vector<8x128xf32>
    %c0_2 = arith.constant 0 : index
    %c0_3 = arith.constant 0 : index
    %4 = vector.load %arg2[%c0_2, %c0_3] : memref<8x1xf32, #tpu.memory_space<vmem>>, vector<8x1xf32>
    %c0_4 = arith.constant 0 : index
    %c0_5 = arith.constant 0 : index
    %5 = vector.load %arg4[%c0_4, %c0_5] : memref<8x1xf32, #tpu.memory_space<vmem>>, vector<8x1xf32>
    %cst = arith.constant 0.000000e+00 : f32
    %6 = vector.broadcast %cst : f32 to vector<8x128xf32>
    %7 = arith.maximumf %3, %6 : vector<8x128xf32>
    %8 = vector.broadcast %cst : f32 to vector<8x128xf32>
    %9 = arith.subf %3, %8 : vector<8x128xf32>
    %10 = arith.cmpf one, %9, %9 : vector<8x128xf32>
    %11 = vector.broadcast %cst : f32 to vector<8x128xf32>
    %12 = arith.addf %3, %11 : vector<8x128xf32>
    %13 = math.absf %9 : vector<8x128xf32>
    %cst_6 = arith.constant 0.000000e+00 : f32
    %14 = vector.broadcast %cst_6 : f32 to vector<8x128xf32>
    %15 = arith.subf %14, %13 : vector<8x128xf32>
    %16 = math.exp %15 : vector<8x128xf32>
    %17 = math.log1p %16 : vector<8x128xf32>
    %18 = arith.addf %7, %17 : vector<8x128xf32>
    %19 = arith.select %10, %12, %18 : vector<8x128xi1>, vector<8x128xf32>
    %cst_7 = arith.constant 0.000000e+00 : f32
    %20 = vector.broadcast %cst_7 : f32 to vector<8x128xf32>
    %21 = arith.subf %20, %19 : vector<8x128xf32>
    %cst_8 = arith.constant dense<0xFF800000> : vector<8xf32>
    %22 = vector.multi_reduction <maximumf>, %3, %cst_8 [1] : vector<8x128xf32> to vector<8xf32>
    %23 = vector.shape_cast %22 : vector<8xf32> to vector<8x1xf32>
    %24 = vector.broadcast %23 : vector<8x1xf32> to vector<8x128xf32>
    %25 = arith.subf %3, %24 : vector<8x128xf32>
    %26 = math.exp %25 : vector<8x128xf32>
    %27 = arith.mulf %26, %21 : vector<8x128xf32>
    %cst_9 = arith.constant dense<0.000000e+00> : vector<8xf32>
    %28 = vector.multi_reduction <add>, %27, %cst_9 [1] : vector<8x128xf32> to vector<8xf32>
    %29 = vector.shape_cast %28 : vector<8xf32> to vector<8x1xf32>
    %cst_10 = arith.constant dense<0.000000e+00> : vector<8xf32>
    %30 = vector.multi_reduction <add>, %26, %cst_10 [1] : vector<8x128xf32> to vector<8xf32>
    %31 = vector.shape_cast %30 : vector<8xf32> to vector<8x1xf32>
    %32 = tpu.reciprocal %31 : vector<8x1xf32> -> vector<8x1xf32>
    %33 = arith.mulf %29, %32 : vector<8x1xf32>
    %cst_11 = arith.constant 0.000000e+00 : f32
    %34 = vector.broadcast %cst_11 : f32 to vector<8x1xf32>
    %35 = arith.subf %34, %4 : vector<8x1xf32>
    %cst_12 = arith.constant 0.000000e+00 : f32
    %36 = vector.broadcast %cst_12 : f32 to vector<8x1xf32>
    %37 = arith.maximumf %35, %36 : vector<8x1xf32>
    %38 = vector.broadcast %cst_12 : f32 to vector<8x1xf32>
    %39 = arith.subf %35, %38 : vector<8x1xf32>
    %40 = arith.cmpf one, %39, %39 : vector<8x1xf32>
    %41 = vector.broadcast %cst_12 : f32 to vector<8x1xf32>
    %42 = arith.addf %35, %41 : vector<8x1xf32>
    %43 = math.absf %39 : vector<8x1xf32>
    %cst_13 = arith.constant 0.000000e+00 : f32
    %44 = vector.broadcast %cst_13 : f32 to vector<8x1xf32>
    %45 = arith.subf %44, %43 : vector<8x1xf32>
    %46 = math.exp %45 : vector<8x1xf32>
    %47 = math.log1p %46 : vector<8x1xf32>
    %48 = arith.addf %37, %47 : vector<8x1xf32>
    %49 = arith.select %40, %42, %48 : vector<8x1xi1>, vector<8x1xf32>
    %cst_14 = arith.constant 0.000000e+00 : f32
    %50 = vector.broadcast %cst_14 : f32 to vector<8x1xf32>
    %51 = arith.subf %50, %49 : vector<8x1xf32>
    %c0_15 = arith.constant 0 : index
    %c0_16 = arith.constant 0 : index
    %52 = vector.load %arg6[%c0_15, %c0_16] : memref<8x1xf32, #tpu.memory_space<vmem>>, vector<8x1xf32>
    %53 = arith.mulf %5, %51 : vector<8x1xf32>
    %54 = arith.addf %52, %53 : vector<8x1xf32>
    %c0_17 = arith.constant 0 : index
    %c0_18 = arith.constant 0 : index
    %55 = vector.load %arg6[%c0_17, %c0_18] : memref<8x1xf32, #tpu.memory_space<vmem>>, vector<8x1xf32>
    tpu.vector_store %arg6[%c0_17, %c0_18], %54 {strides = array<i32>} : memref<8x1xf32, #tpu.memory_space<vmem>>, vector<8x1xf32>,
    %c0_19 = arith.constant 0 : index
    %c0_20 = arith.constant 0 : index
    %56 = vector.load %arg7[%c0_19, %c0_20] : memref<8x1xf32, #tpu.memory_space<vmem>>, vector<8x1xf32>
    %57 = arith.mulf %5, %33 : vector<8x1xf32>
    %58 = arith.addf %56, %57 : vector<8x1xf32>
    %c0_21 = arith.constant 0 : index
    %c0_22 = arith.constant 0 : index
    %59 = vector.load %arg7[%c0_21, %c0_22] : memref<8x1xf32, #tpu.memory_space<vmem>>, vector<8x1xf32>
    tpu.vector_store %arg7[%c0_21, %c0_22], %58 {strides = array<i32>} : memref<8x1xf32, #tpu.memory_space<vmem>>, vector<8x1xf32>,
    %c0_23 = arith.constant 0 : index
    %c0_24 = arith.constant 0 : index
    %60 = vector.load %arg8[%c0_23, %c0_24] : memref<8x1xf32, #tpu.memory_space<vmem>>, vector<8x1xf32>
    %61 = arith.addf %60, %5 : vector<8x1xf32>
    %c0_25 = arith.constant 0 : index
    %c0_26 = arith.constant 0 : index
    %62 = vector.load %arg8[%c0_25, %c0_26] : memref<8x1xf32, #tpu.memory_space<vmem>>, vector<8x1xf32>
    tpu.vector_store %arg8[%c0_25, %c0_26], %61 {strides = array<i32>} : memref<8x1xf32, #tpu.memory_space<vmem>>, vector<8x1xf32>,
    %c0_i32_27 = arith.constant 0 : i32
    %63 = arith.cmpi eq, %arg1, %c0_i32_27 : i32
    %64 = arith.extui %63 : i1 to i32
    %c0_i32_28 = arith.constant 0 : i32
    %65 = arith.cmpi ne, %64, %c0_i32_28 : i32
    scf.if %65 {
      %66 = tpu.iota {dimensions = array<i32: 1>} : vector<1x128xi32>
      %c0_i32_29 = arith.constant 0 : i32
      %67 = vector.broadcast %c0_i32_29 : i32 to vector<1x128xi32>
      %68 = arith.cmpi eq, %66, %67 : vector<1x128xi32>
      %c0_30 = arith.constant 0 : index
      %c0_31 = arith.constant 0 : index
      %69 = vector.load %arg6[%c0_30, %c0_31] : memref<8x1xf32, #tpu.memory_space<vmem>>, vector<8x1xf32>
      %70 = vector.shape_cast %69 : vector<8x1xf32> to vector<1x8x1xf32>
      %cst_32 = arith.constant dense<0.000000e+00> : vector<1xf32>
      %71 = vector.multi_reduction <add>, %70, %cst_32 [1, 2] : vector<1x8x1xf32> to vector<1xf32>
      %72 = vector.shape_cast %71 : vector<1xf32> to vector<1x1x1xf32>
      %73 = vector.extract %72[0, 0, 0] : f32 from vector<1x1x1xf32>
      %cst_33 = arith.constant 0.000000e+00 : f32
      %74 = vector.broadcast %73 : f32 to vector<1x128xf32>
      %75 = vector.broadcast %cst_33 : f32 to vector<1x128xf32>
      %76 = arith.select %68, %74, %75 : vector<1x128xi1>, vector<1x128xf32>
      %c1_i32 = arith.constant 1 : i32
      %77 = vector.broadcast %c1_i32 : i32 to vector<1x128xi32>
      %78 = arith.cmpi eq, %66, %77 : vector<1x128xi32>
      %c0_34 = arith.constant 0 : index
      %c0_35 = arith.constant 0 : index
      %79 = vector.load %arg7[%c0_34, %c0_35] : memref<8x1xf32, #tpu.memory_space<vmem>>, vector<8x1xf32>
      %80 = vector.shape_cast %79 : vector<8x1xf32> to vector<1x8x1xf32>
      %cst_36 = arith.constant dense<0.000000e+00> : vector<1xf32>
      %81 = vector.multi_reduction <add>, %80, %cst_36 [1, 2] : vector<1x8x1xf32> to vector<1xf32>
      %82 = vector.shape_cast %81 : vector<1xf32> to vector<1x1x1xf32>
      %83 = vector.extract %82[0, 0, 0] : f32 from vector<1x1x1xf32>
      %84 = vector.broadcast %83 : f32 to vector<1x128xf32>
      %85 = arith.select %78, %84, %76 : vector<1x128xi1>, vector<1x128xf32>
      %c2_i32 = arith.constant 2 : i32
      %86 = vector.broadcast %c2_i32 : i32 to vector<1x128xi32>
      %87 = arith.cmpi eq, %66, %86 : vector<1x128xi32>
      %c0_37 = arith.constant 0 : index
      %c0_38 = arith.constant 0 : index
      %88 = vector.load %arg8[%c0_37, %c0_38] : memref<8x1xf32, #tpu.memory_space<vmem>>, vector<8x1xf32>
      %89 = vector.shape_cast %88 : vector<8x1xf32> to vector<1x8x1xf32>
      %cst_39 = arith.constant dense<0.000000e+00> : vector<1xf32>
      %90 = vector.multi_reduction <add>, %89, %cst_39 [1, 2] : vector<1x8x1xf32> to vector<1xf32>
      %91 = vector.shape_cast %90 : vector<1xf32> to vector<1x1x1xf32>
      %92 = vector.extract %91[0, 0, 0] : f32 from vector<1x1x1xf32>
      %93 = vector.broadcast %92 : f32 to vector<1x128xf32>
      %94 = arith.select %87, %93, %85 : vector<1x128xi1>, vector<1x128xf32>
      %c0_40 = arith.constant 0 : index
      %c0_41 = arith.constant 0 : index
      %95 = vector.load %arg5[%c0_40, %c0_41] : memref<1x128xf32, #tpu.memory_space<vmem>>, vector<1x128xf32>
      tpu.vector_store %arg5[%c0_40, %c0_41], %94 {strides = array<i32>} : memref<1x128xf32, #tpu.memory_space<vmem>>, vector<1x128xf32>,
    } else {
    }
    return
  }
  func.func @transform_0(%arg0: i32, %arg1: i32) -> (i32, i32) {
    %c1_i32 = arith.constant 1 : i32
    %0 = arith.muli %arg0, %c1_i32 : i32
    %1 = arith.addi %0, %arg1 : i32
    %c0_i32 = arith.constant 0 : i32
    %c0_i32_0 = arith.constant 0 : i32
    return %1, %c0_i32 : i32, i32
  }
  func.func @transform_1(%arg0: i32, %arg1: i32) -> (i32, i32) {
    %c1_i32 = arith.constant 1 : i32
    %0 = arith.muli %arg0, %c1_i32 : i32
    %1 = arith.addi %0, %arg1 : i32
    %c0_i32 = arith.constant 0 : i32
    %c0_i32_0 = arith.constant 0 : i32
    return %1, %c0_i32 : i32, i32
  }
  func.func @transform_2(%arg0: i32, %arg1: i32) -> (i32, i32) {
    %c1_i32 = arith.constant 1 : i32
    %0 = arith.muli %arg0, %c1_i32 : i32
    %1 = arith.addi %0, %arg1 : i32
    %c0_i32 = arith.constant 0 : i32
    %c0_i32_0 = arith.constant 0 : i32
    return %1, %c0_i32 : i32, i32
  }
  func.func @transform_3(%arg0: i32, %arg1: i32) -> (i32, i32) {
    %c0_i32 = arith.constant 0 : i32
    %c0_i32_0 = arith.constant 0 : i32
    return %c0_i32, %arg0 : i32, i32
  }
}

</mosaic_0001>

<llo_original>
// kernel: tpu_custom_call.1
$region0: #{tpu_custom_call.1}
  #allocation0 [shape = 'u32[]', space=smem, size = 0x4, offset = 0x4, fixed_abs, tag = 'smem constant byte address 0x4 - core index']
  #allocation1 [shape = 'u32[72,128]{1,0:T(1,128)}', space=vmem, size = 0x9000, scoped, tag = 'internal scratch']
  #allocation2 [shape = 'f32[8,1]{1,0:T(8,128)}', space=vmem, size = 0x1000, scoped, tag = 'scratch operand']
  #allocation3 [shape = 'f32[8,1]{1,0:T(8,128)}', space=vmem, size = 0x1000, scoped, tag = 'scratch operand']
  #allocation4 [shape = 'f32[8,1]{1,0:T(8,128)}', space=vmem, size = 0x1000, scoped, tag = 'scratch operand']
  %s0 = inlined_call_operand.vmem [shape: f32[8,1], index: 0, kind: input, shape index: {}]
  %s1 = inlined_call_operand.vmem [shape: f32[8,128], index: 1, kind: input, shape index: {}]
  %s2 = inlined_call_operand.vmem [shape: f32[8,1], index: 2, kind: input, shape index: {}]
  %s3 = inlined_call_operand.hbm [shape: f32[1,128], index: 3, kind: output, shape index: {}]
  %s4 = sld [smem:[#allocation0]]
  $region30: #{tpu_custom_call.1} parent=0
    _
  %s6 = ssub.s32 1, %s4
  %s7 = scalar_select 0, %s6, %s4
  $region1: #{tpu_custom_call.1} parent=0
    #allocation5 [shape = 'u8[512]{0}', space=vmem, size = 0x400, scoped, tag = 'output window, operand 0, single buffered']
    #allocation6 [shape = 's32[1]{0}', space=sflag, size = 0x4, scoped, tag = 'scoped memory for tpu_custom_call.1']
    %8 = vsyncpa [#allocation6], 0
    // Predicated region
    $region2: #{tpu_custom_call.1} parent=1 // pred_check
      _
    $region3: #{tpu_custom_call.1} parent=1 // pred_check_branch
      %10 = sbr.rel (0) target = $region5
    $region4: #{tpu_custom_call.1} parent=1 // pred_region
      %s11 = sadd.s32 0, 0
      %p12 = scmp.lt.s32.totalorder %s11, 0
      %s13 = scalar_select %p12, %s11, 0
      %s14 = smul.addr %s13, 8
      %s15 = scalar_lea.vmem %s0, %s14
      %s16 = sadd.s32 0, 0
    $region5: #{tpu_custom_call.1} parent=1 // pred_fallthru
      _
    // Predicated region
    $region6: #{tpu_custom_call.1} parent=1 // pred_check
      _
    $region7: #{tpu_custom_call.1} parent=1 // pred_check_branch
      %18 = sbr.rel (0) target = $region9
    $region8: #{tpu_custom_call.1} parent=1 // pred_region
      %s19 = sadd.s32 0, 0
      %p20 = scmp.lt.s32.totalorder %s19, 0
      %s21 = scalar_select %p20, %s19, 0
      %s22 = smul.addr %s21, 8
      %s23 = scalar_lea.vmem %s1, %s22
      %s24 = sadd.s32 0, 0
    $region9: #{tpu_custom_call.1} parent=1 // pred_fallthru
      _
    // Predicated region
    $region10: #{tpu_custom_call.1} parent=1 // pred_check
      _
    $region11: #{tpu_custom_call.1} parent=1 // pred_check_branch
      %26 = sbr.rel (0) target = $region13
    $region12: #{tpu_custom_call.1} parent=1 // pred_region
      %s27 = sadd.s32 0, 0
      %p28 = scmp.lt.s32.totalorder %s27, 0
      %s29 = scalar_select %p28, %s27, 0
      %s30 = smul.addr %s29, 8
      %s31 = scalar_lea.vmem %s2, %s30
      %s32 = sadd.s32 0, 0
    $region13: #{tpu_custom_call.1} parent=1 // pred_fallthru
      _
    %s33 = sadd.s32 0, 0
    %p34 = scmp.lt.s32.totalorder %s33, 0
    %s35 = scalar_select %p34, %s33, 0
    %s36 = smul.addr %s35, 8
    %s37 = scalar_lea.vmem %s0, %s36
    %s38 = sadd.s32 0, 0
    %p39 = scmp.lt.s32.totalorder %s38, 0
    %s40 = scalar_select %p39, %s38, 0
    %s41 = smul.addr %s40, 8
    %s42 = scalar_lea.vmem %s1, %s41
    %s43 = sadd.s32 0, 0
    %p44 = scmp.lt.s32.totalorder %s43, 0
    %s45 = scalar_select %p44, %s43, 0
    %s46 = smul.addr %s45, 8
    %s47 = scalar_lea.vmem %s2, %s46
    %s48 = sadd.s32 0, 0
    %p49 = scmp.lt.s32.totalorder %s48, 0
    %s50 = scalar_select %p49, %s48, 0
    %s51 = smul.addr %s50, 8
    %s52 = scalar_lea.vmem %s0, %s51
    %s53 = sadd.s32 0, 0
    %s54 = sadd.s32 0, 0
    %p55 = scmp.lt.s32.totalorder %s54, 0
    %s56 = scalar_select %p55, %s54, 0
    %s57 = smul.addr %s56, 8
    %s58 = scalar_lea.vmem %s1, %s57
    %s59 = sadd.s32 0, 0
    %s60 = sadd.s32 0, 0
    %p61 = scmp.lt.s32.totalorder %s60, 0
    %s62 = scalar_select %p61, %s60, 0
    %s63 = smul.addr %s62, 8
    %s64 = scalar_lea.vmem %s2, %s63
    %s65 = sadd.s32 0, 0
    %p66 = scmp.eq.s32.totalorder 0, 0
    // Predicated region
    $region14: #{tpu_custom_call.1} parent=1 // pred_check
      %p67 = pneg %p66
    $region15: #{tpu_custom_call.1} parent=1 // pred_check_branch
      %69 = sbr.rel (%p67) target = $region17
    $region16: #{tpu_custom_call.1} parent=1 // pred_region
      %vm70 = vcmask 7168
      %71 = vst.msk [vmem:[#allocation2] sm:$0xff] %vm70, 0.0
      %72 = vst.msk [vmem:[#allocation3] sm:$0xff] %vm70, 0.0
      %73 = vst.msk [vmem:[#allocation4] sm:$0xff] %vm70, 0.0
    $region17: #{tpu_custom_call.1} parent=1 // pred_fallthru
      _
    %v74 = vld [vmem:[%s58] sm:$0xff]
    %v75 = vld [vmem:[%s52] sm:$0xff]
    %v76 = vld [vmem:[%s64] sm:$0xff]
    %v77 = vmax.f32 %v74, 0.0
    %vm78 = vcmp.ne.f32.partialorder %v74, %v74
    %v79 = vadd.f32 %v74, 0.0
    %v80 = vand.u32 2147483647, %v74
    %v81 = vsub.f32 0.0, %v80
    %v82 = vmul.f32 %v81, 1.442695
    %v83 = vpow.pop %v82
    %v84 = vadd.f32 %v83, 1.0
    %v85 = vlog2.pop %v84
    %v86 = vmul.f32 %v85, 0.6931472
    %v87 = vmul.f32 -0.5, %v83
    %v88 = vadd.f32 %v87, 1.0
    %v89 = vmul.f32 %v88, %v83
    %v90 = vand.u32 2147483647, %v83
    %vm91 = vcmp.lt.f32.partialorder %v90, 0.0004427343
    %v92 = vsel %vm91, %v89, %v86
    %v93 = vadd.f32 %v77, %v92
    %v94 = vsel %vm78, %v79, %v93
    %v95 = vsub.f32 0.0, %v94
    %96 = vmax.xlane.f32.xlu0 %v74
    %v97 = vpop.xlane.xlu0 %96
    %v98 = vsub.f32 %v74, %v97
    %v99 = vmul.f32 %v98, 1.442695
    %v100 = vpow.pop %v99
    %v101 = vmul.f32 %v100, %v95
    %102 = vadd.xlane.f32.xlu0 %v101
    %v103 = vpop.xlane.xlu0 %102
    %104 = vadd.xlane.f32.xlu0 %v100
    %v105 = vpop.xlane.xlu0 %104
    %v106 = vrcp.pop %v105
    %v107 = vmul.f32 %v105, %v106
    %v108 = vsub.f32 1.0, %v107
    %v109 = vmul.f32 %v106, %v108
    %v110 = vadd.f32 %v106, %v109
    %vm111 = vweird.f32 %v105
    %vm112 = vweird.f32 %v106
    %vm113 = vmor %vm111, %vm112
    %v114 = vsel %vm113, %v106, %v110
    %v115 = vand.u32 2147483647, %v105
    %vm116 = vcmp.eq.f32.partialorder %v115, 8.507059e+37
    %v117 = vand.u32 %v105, 2147483648
    %v118 = vor.u32 1.1754944e-38, %v117
    %v119 = vsel %vm116, %v118, %v114
    %v120 = vmul.f32 %v103, %v119
    %v121 = vsub.f32 0.0, %v75
    %v122 = vmax.f32 %v121, 0.0
    %vm123 = vcmp.ne.f32.partialorder %v121, %v121
    %v124 = vadd.f32 %v121, 0.0
    %v125 = vand.u32 2147483647, %v121
    %v126 = vsub.f32 0.0, %v125
    %v127 = vmul.f32 %v126, 1.442695
    %v128 = vpow.pop %v127
    %v129 = vadd.f32 %v128, 1.0
    %v130 = vlog2.pop %v129
    %v131 = vmul.f32 %v130, 0.6931472
    %v132 = vmul.f32 -0.5, %v128
    %v133 = vadd.f32 %v132, 1.0
    %v134 = vmul.f32 %v133, %v128
    %v135 = vand.u32 2147483647, %v128
    %vm136 = vcmp.lt.f32.partialorder %v135, 0.0004427343
    %v137 = vsel %vm136, %v134, %v131
    %v138 = vadd.f32 %v122, %v137
    %v139 = vsel %vm123, %v124, %v138
    %v140 = vsub.f32 0.0, %v139
    %v141 = vld [vmem:[#allocation2] sm:$0xff]
    %v142 = vmul.f32 %v76, %v140
    %v143 = vadd.f32 %v141, %v142
    %vm144 = vcmask 7168
    %145 = vst.msk [vmem:[#allocation2] sm:$0xff] %vm144, %v143
    %v146 = vld [vmem:[#allocation3] sm:$0xff]
    %v147 = vmul.f32 %v76, %v120
    %v148 = vadd.f32 %v146, %v147
    %149 = vst.msk [vmem:[#allocation3] sm:$0xff] %vm144, %v148
    %v150 = vld [vmem:[#allocation4] sm:$0xff]
    %v151 = vadd.f32 %v150, %v76
    %152 = vst.msk [vmem:[#allocation4] sm:$0xff] %vm144, %v151
    // Predicated region
    $region18: #{tpu_custom_call.1} parent=1 // pred_check
      %p153 = pneg %p66
    $region19: #{tpu_custom_call.1} parent=1 // pred_check_branch
      %155 = sbr.rel (%p153) target = $region21
    $region20: #{tpu_custom_call.1} parent=1 // pred_region
      %v156 = vlaneseq
      %v157 = vand.u32 %v156, 127
      %vm158 = vcmp.eq.s32.totalorder %v157, 0
      %v159 = vld [vmem:[#allocation2] sm:$0xff]
      %v160 = vsel %vm144, %v159, 0.0
      %161 = vadd.xlane.f32.xlu0 %v160
      %v162 = vpop.xlane.xlu0 %161
      %v163 = vrot.slane %v162, 4
      %v164 = vadd.f32 %v162, %v163
      %v165 = vrot.slane %v164, 2
      %v166 = vadd.f32 %v164, %v165
      %v167 = vrot.slane %v166, 1
      %v168 = vadd.f32 %v166, %v167
      %s169 = vtos %v168
      %v170 = vstv %s169
      %v171 = vsel %vm158, %v170, 0.0
      %vm172 = vcmp.eq.s32.totalorder %v157, 1
      %v173 = vld [vmem:[#allocation3] sm:$0xff]
      %v174 = vsel %vm144, %v173, 0.0
      %175 = vadd.xlane.f32.xlu0 %v174
      %v176 = vpop.xlane.xlu0 %175
      %v177 = vrot.slane %v176, 4
      %v178 = vadd.f32 %v176, %v177
      %v179 = vrot.slane %v178, 2
      %v180 = vadd.f32 %v178, %v179
      %v181 = vrot.slane %v180, 1
      %v182 = vadd.f32 %v180, %v181
      %s183 = vtos %v182
      %v184 = vstv %s183
      %v185 = vsel %vm172, %v184, %v171
      %vm186 = vcmp.eq.s32.totalorder %v157, 2
      %v187 = vld [vmem:[#allocation4] sm:$0xff]
      %v188 = vsel %vm144, %v187, 0.0
      %189 = vadd.xlane.f32.xlu0 %v188
      %v190 = vpop.xlane.xlu0 %189
      %v191 = vrot.slane %v190, 4
      %v192 = vadd.f32 %v190, %v191
      %v193 = vrot.slane %v192, 2
      %v194 = vadd.f32 %v192, %v193
      %v195 = vrot.slane %v194, 1
      %v196 = vadd.f32 %v194, %v195
      %s197 = vtos %v196
      %v198 = vstv %s197
      %v199 = vsel %vm186, %v198, %v185
      %200 = vst [vmem:[#allocation5] sm:$0x1] %v199
    $region21: #{tpu_custom_call.1} parent=1 // pred_fallthru
      _
    // Predicated region
    $region22: #{tpu_custom_call.1} parent=1 // pred_check
      _
    $region23: #{tpu_custom_call.1} parent=1 // pred_check_branch
      %202 = sbr.rel (0) target = $region25
    $region24: #{tpu_custom_call.1} parent=1 // pred_region
      %204 = vsyncadd [#allocation6], 0
      %s206 = sshll.u32 [#allocation5], 4
      %s207 = int_to_ptr.vmem [resolvable:$true] %s206
      %s208 = sshll.u32 %s3, 4
      %s209 = int_to_ptr.hbm [resolvable:$true] %s208
      %211 = dma.vmem_to_hbm [thread:$0]  %s207, 16, %s209, [#allocation6]
    $region25: #{tpu_custom_call.1} parent=1 // pred_fallthru
      _
    // Predicated region
    $region26: #{tpu_custom_call.1} parent=1 // pred_check
      _
    $region27: #{tpu_custom_call.1} parent=1 // pred_check_branch
      %213 = sbr.rel (0) target = $region29
    $region28: #{tpu_custom_call.1} parent=1 // pred_region
      %215 = dma.done [#allocation6], 16
    $region29: #{tpu_custom_call.1} parent=1 // pred_fallthru
      _
    %216 = vsyncpa [#allocation6], 1

</llo_original>
